<compile_context>
chip_gen: v7x
topology: tpu7x:2x2x1
jax: 0.10.0
libtpu: 0.0.40
codegen_flags: <defaults>
</compile_context>

<pallas_src>
import functools

import jax
import jax.numpy as jnp
from jax import lax
from jax.experimental import pallas as pl
from jax.experimental.pallas import tpu as pltpu


def _round_up(x, m):
    return (x + m - 1) // m * m


def _dloss_kernel(fake_ref, real_ref, out_ref, acc_ref, *, b, n, bt, nt):
    j = pl.program_id(0)            # spatial tile index (parallel)
    i = pl.program_id(1)            # batch tile index (reduction, innermost)

    @pl.when(i == 0)
    def _init():
        acc_ref[...] = jnp.zeros_like(acc_ref)

    df = fake_ref[...].astype(jnp.float32)           # (bt, nt)
    dr = real_ref[...].astype(jnp.float32) - 1.0     # (bt, nt)
    contrib = df * df + dr * dr

    # Zero out out-of-range rows / lanes of ragged edge blocks (Pallas pads
    # partial blocks with unspecified values, it does not zero them).
    if b % bt != 0:
        row = i * bt + lax.broadcasted_iota(jnp.int32, (bt, nt), 0)
        contrib = jnp.where(row < b, contrib, 0.0)
    if n % nt != 0:
        lane = j * nt + lax.broadcasted_iota(jnp.int32, (bt, nt), 1)
        contrib = jnp.where(lane < n, contrib, 0.0)

    # Dense full-vreg accumulation each step; the cross-sublane (XLU) reduce
    # and the 0.5 scale run only once per spatial tile.
    acc_ref[...] += contrib

    @pl.when(i == pl.num_programs(1) - 1)
    def _finalize():
        out_ref[...] = 0.5 * jnp.sum(acc_ref[...], axis=0, keepdims=True)


def _choose_tiles(b, n, itemsize, block_bytes):
    # Sublane granularity for the input dtype (f32: 8, bf16/f16: 16, 8-bit: 32).
    sub = {4: 8, 2: 16, 1: 32}.get(itemsize, 8)
    elems = max(1, block_bytes // itemsize)       # elements per input block

    # Batch tile: whole batch if tiny (block == full array dim bypasses the
    # sublane rule), otherwise one sublane group (may be grown below).
    bt = b if b <= sub else sub

    # Lane tile: whole spatial dim if it fits the byte budget (no padding, no
    # lane mask needed), otherwise a 128-multiple slice with a masked edge.
    nt_budget = max(128, (elems // bt) // 128 * 128)
    nt = n if n <= nt_budget else nt_budget

    # v7x megacore: prefer >= 2 spatial tiles when halving still leaves >=1 MiB
    # per input block per step (a no-op cost on single-TensorCore chips).
    if nt == n and n >= 2 * 128 and bt * (n // 2) * itemsize >= (1 << 20):
        nt = _round_up(-(-n // 2), 128)

    # Large batch + small spatial dim: fold more batch rows per step (in
    # sublane-group multiples) so each step still moves ~block_bytes.
    if nt == n and b > sub:
        bt = max(sub, min((elems // max(n, 1)) // sub * sub, (b // sub) * sub))

    return bt, nt


def dloss(proba_fake, proba_real, *, block_bytes=4 << 20):
    b, c, l = proba_fake.shape
    assert proba_real.shape == (b, c, l)
    n = c * l

    dtype = jnp.promote_types(proba_fake.dtype, proba_real.dtype)
    if not jnp.issubdtype(dtype, jnp.floating):
        dtype = jnp.float32
    # Flat (B, N) views; reshape/astype of already-f32 contiguous inputs is free.
    fake2d = proba_fake.reshape(b, n).astype(dtype)
    real2d = proba_real.reshape(b, n).astype(dtype)

    itemsize = jnp.dtype(dtype).itemsize
    bt, nt = _choose_tiles(b, n, itemsize, block_bytes)
    grid = (pl.cdiv(n, nt), pl.cdiv(b, bt))   # (spatial, batch) — batch innermost

    kernel = functools.partial(_dloss_kernel, b=b, n=n, bt=bt, nt=nt)

    # Footprint: 2 inputs x 2 buffers x block + f32 accumulator + output bufs.
    vmem_bytes = 4 * bt * nt * itemsize + bt * nt * 4 + 2 * nt * 4
    vmem_limit = int(min(max(vmem_bytes + (8 << 20), 16 << 20), 48 << 20))

    out = pl.pallas_call(
        kernel,
        out_shape=jax.ShapeDtypeStruct((1, n), jnp.float32),
        grid_spec=pltpu.PrefetchScalarGridSpec(
            num_scalar_prefetch=0,
            grid=grid,
            in_specs=[
                pl.BlockSpec((bt, nt), lambda j, i: (i, j)),
                pl.BlockSpec((bt, nt), lambda j, i: (i, j)),
            ],
            # Output block index independent of the batch axis -> resident in
            # VMEM across the reduction, single HBM writeback per spatial tile.
            out_specs=pl.BlockSpec((1, nt), lambda j, i: (0, j)),
            scratch_shapes=[pltpu.VMEM((bt, nt), jnp.float32)],
        ),
        compiler_params=pltpu.CompilerParams(
            # spatial axis shardable across TensorCores (v7x megacore);
            # batch axis is the reduction -> "arbitrary".
            dimension_semantics=("parallel", "arbitrary"),
            vmem_limit_bytes=vmem_limit,
        ),
        cost_estimate=pl.CostEstimate(
            flops=5 * b * n,
            transcendentals=0,
            bytes_accessed=2 * b * n * itemsize + n * 4,
        ),
    )(fake2d, real2d)

    return out[0].reshape(c, l)


def dloss_ref(proba_fake, proba_real):
    # Pure-JAX reference mirroring the PyTorch loop.
    b = proba_fake.shape[0]
    loss = 0.0
    for i in range(b):
        df = proba_fake[i].astype(jnp.float32)
        dr = proba_real[i].astype(jnp.float32)
        loss = loss + 0.5 * df**2 + 0.5 * (dr - 1.0) ** 2
    return loss


if __name__ == "__main__":
    key = jax.random.PRNGKey(0)
    k1, k2 = jax.random.split(key)

    B, C, L = 2, 4, 8
    proba_fake = jax.random.normal(k1, (B, C, L), dtype=jnp.float32)
    proba_real = jax.random.normal(k2, (B, C, L), dtype=jnp.float32)

    out = dloss(proba_fake, proba_real)
    out = jax.block_until_ready(out)

    ref = dloss_ref(proba_fake, proba_real)
    assert out.shape == (C, L)
    assert jnp.allclose(out, ref, atol=1e-5, rtol=1e-5), "mismatch vs reference"

    print("KERNEL_OK")
</pallas_src>

<mosaic_0001>
module attributes {stable_mosaic.version = 11 : i64} {
  func.func @_dloss_kernel(%arg0: i32, %arg1: i32, %arg2: memref<2x32xf32, #tpu.memory_space<vmem>>, %arg3: memref<2x32xf32, #tpu.memory_space<vmem>>, %arg4: memref<1x32xf32, #tpu.memory_space<vmem>>, %arg5: memref<2x32xf32, #tpu.memory_space<vmem>>) attributes {dimension_semantics = [#tpu.dimension_semantics<parallel>, #tpu.dimension_semantics<arbitrary>], iteration_bounds = array<i64: 1, 1>, scalar_prefetch = 0 : i64, scratch_operands = 1 : i64, tpu.core_type = #tpu.core_type<tc>, window_params = [{transform_indices = @transform_0, window_bounds = array<i64: 2, 32>}, {transform_indices = @transform_1, window_bounds = array<i64: 2, 32>}, {transform_indices = @transform_2, window_bounds = array<i64: 1, 32>}]} {
    %c0_i32 = arith.constant 0 : i32
    %0 = arith.cmpi eq, %arg1, %c0_i32 : i32
    %1 = arith.extui %0 : i1 to i32
    %c0_i32_0 = arith.constant 0 : i32
    %2 = arith.cmpi ne, %1, %c0_i32_0 : i32
    scf.if %2 {
      %cst_10 = arith.constant 0.000000e+00 : f32
      %16 = vector.broadcast %cst_10 : f32 to vector<2x32xf32>
      %c0_11 = arith.constant 0 : index
      %c0_12 = arith.constant 0 : index
      %17 = vector.load %arg5[%c0_11, %c0_12] : memref<2x32xf32, #tpu.memory_space<vmem>>, vector<2x32xf32>
      tpu.vector_store %arg5[%c0_11, %c0_12], %16 {strides = array<i32>} : memref<2x32xf32, #tpu.memory_space<vmem>>, vector<2x32xf32>,
    } else {
    }
    %c0 = arith.constant 0 : index
    %c0_1 = arith.constant 0 : index
    %3 = vector.load %arg2[%c0, %c0_1] : memref<2x32xf32, #tpu.memory_space<vmem>>, vector<2x32xf32>
    %c0_2 = arith.constant 0 : index
    %c0_3 = arith.constant 0 : index
    %4 = vector.load %arg3[%c0_2, %c0_3] : memref<2x32xf32, #tpu.memory_space<vmem>>, vector<2x32xf32>
    %cst = arith.constant 1.000000e+00 : f32
    %5 = vector.broadcast %cst : f32 to vector<2x32xf32>
    %6 = arith.subf %4, %5 : vector<2x32xf32>
    %7 = arith.mulf %3, %3 : vector<2x32xf32>
    %8 = arith.mulf %6, %6 : vector<2x32xf32>
    %9 = arith.addf %7, %8 : vector<2x32xf32>
    %c0_4 = arith.constant 0 : index
    %c0_5 = arith.constant 0 : index
    %10 = vector.load %arg5[%c0_4, %c0_5] : memref<2x32xf32, #tpu.memory_space<vmem>>, vector<2x32xf32>
    %11 = arith.addf %10, %9 : vector<2x32xf32>
    %c0_6 = arith.constant 0 : index
    %c0_7 = arith.constant 0 : index
    %12 = vector.load %arg5[%c0_6, %c0_7] : memref<2x32xf32, #tpu.memory_space<vmem>>, vector<2x32xf32>
    tpu.vector_store %arg5[%c0_6, %c0_7], %11 {strides = array<i32>} : memref<2x32xf32, #tpu.memory_space<vmem>>, vector<2x32xf32>,
    %c0_i32_8 = arith.constant 0 : i32
    %13 = arith.cmpi eq, %arg1, %c0_i32_8 : i32
    %14 = arith.extui %13 : i1 to i32
    %c0_i32_9 = arith.constant 0 : i32
    %15 = arith.cmpi ne, %14, %c0_i32_9 : i32
    scf.if %15 {
      %c0_10 = arith.constant 0 : index
      %c0_11 = arith.constant 0 : index
      %16 = vector.load %arg5[%c0_10, %c0_11] : memref<2x32xf32, #tpu.memory_space<vmem>>, vector<2x32xf32>
      %cst_12 = arith.constant dense<0.000000e+00> : vector<32xf32>
      %17 = vector.multi_reduction <add>, %16, %cst_12 [0] : vector<2x32xf32> to vector<32xf32>
      %18 = vector.shape_cast %17 : vector<32xf32> to vector<1x32xf32>
      %cst_13 = arith.constant 5.000000e-01 : f32
      %19 = vector.broadcast %cst_13 : f32 to vector<1x32xf32>
      %20 = arith.mulf %19, %18 : vector<1x32xf32>
      %c0_14 = arith.constant 0 : index
      %c0_15 = arith.constant 0 : index
      %21 = vector.load %arg4[%c0_14, %c0_15] : memref<1x32xf32, #tpu.memory_space<vmem>>, vector<1x32xf32>
      tpu.vector_store %arg4[%c0_14, %c0_15], %20 {strides = array<i32>} : memref<1x32xf32, #tpu.memory_space<vmem>>, vector<1x32xf32>,
    } else {
    }
    return
  }
  func.func @transform_0(%arg0: i32, %arg1: i32) -> (i32, i32) {
    %c0_i32 = arith.constant 0 : i32
    return %arg1, %arg0 : i32, i32
  }
  func.func @transform_1(%arg0: i32, %arg1: i32) -> (i32, i32) {
    %c0_i32 = arith.constant 0 : i32
    return %arg1, %arg0 : i32, i32
  }
  func.func @transform_2(%arg0: i32, %arg1: i32) -> (i32, i32) {
    %c0_i32 = arith.constant 0 : i32
    %c0_i32_0 = arith.constant 0 : i32
    return %c0_i32, %arg0 : i32, i32
  }
}

</mosaic_0001>

<llo_original>
// kernel: tpu_custom_call.1
$region0: #{tpu_custom_call.1}
  #allocation0 [shape = 'u32[]', space=smem, size = 0x4, offset = 0x4, fixed_abs, tag = 'smem constant byte address 0x4 - core index']
  #allocation1 [shape = 'u32[144,128]{1,0:T(1,128)}', space=vmem, size = 0x12000, scoped, tag = 'internal scratch']
  #allocation2 [shape = 'f32[2,32]{1,0:T(2,128)}', space=vmem, size = 0x400, scoped, tag = 'scratch operand']
  %s0 = inlined_call_operand.hbm [shape: f32[2,32], index: 0, kind: input, shape index: {}]
  %s1 = inlined_call_operand.vmem [shape: f32[2,32], index: 1, kind: input, shape index: {}]
  %s2 = inlined_call_operand.hbm [shape: f32[1,32], index: 2, kind: output, shape index: {}]
  %s3 = sld [smem:[#allocation0]]
  $region30: #{tpu_custom_call.1} parent=0
    _
  %s5 = ssub.s32 1, %s3
  %s6 = scalar_select 0, %s5, %s3
  $region1: #{tpu_custom_call.1} parent=0
    #allocation3 [shape = 'u8[1024]{0}', space=vmem, size = 0x400, scoped, tag = 'input window, operand 0, single buffered']
    #allocation4 [shape = 's32[1]{0}', space=sflag, size = 0x4, scoped, tag = 'scoped memory for tpu_custom_call.1']
    #allocation5 [shape = 's32[1]{0}', space=sflag, size = 0x4, scoped, tag = 'scoped memory for tpu_custom_call.1']
    #allocation6 [shape = 'u8[512]{0}', space=vmem, size = 0x400, scoped, tag = 'output window, operand 0, single buffered']
    %7 = vsyncpa [#allocation4], 0
    %8 = vsyncpa [#allocation5], 0
    // Predicated region
    $region2: #{tpu_custom_call.1} parent=1 // pred_check
      _
    $region3: #{tpu_custom_call.1} parent=1 // pred_check_branch
      %10 = sbr.rel (0) target = $region5
    $region4: #{tpu_custom_call.1} parent=1 // pred_region
      %s12 = ssub.s32 32, 32
      %13 = vsyncadd [#allocation4], %s12
      %s15 = sshll.u32 [#allocation3], 4
      %s16 = int_to_ptr.vmem [resolvable:$true] %s15
      %18 = dma.hbm_to_vmem [thread:$0]  %s0, 32, %s16, [#allocation4]
    $region5: #{tpu_custom_call.1} parent=1 // pred_fallthru
      _
    // Predicated region
    $region6: #{tpu_custom_call.1} parent=1 // pred_check
      _
    $region7: #{tpu_custom_call.1} parent=1 // pred_check_branch
      %20 = sbr.rel (0) target = $region9
    $region8: #{tpu_custom_call.1} parent=1 // pred_region
      _
    $region9: #{tpu_custom_call.1} parent=1 // pred_fallthru
      _
    // Predicated region
    $region10: #{tpu_custom_call.1} parent=1 // pred_check
      _
    $region11: #{tpu_custom_call.1} parent=1 // pred_check_branch
      %22 = sbr.rel (0) target = $region13
    $region12: #{tpu_custom_call.1} parent=1 // pred_region
      %23 = dma.done [#allocation4], 32
    $region13: #{tpu_custom_call.1} parent=1 // pred_fallthru
      _
    %p24 = scmp.eq.s32.totalorder 0, 0
    // Predicated region
    $region14: #{tpu_custom_call.1} parent=1 // pred_check
      %p25 = pneg %p24
    $region15: #{tpu_custom_call.1} parent=1 // pred_check_branch
      %27 = sbr.rel (%p25) target = $region17
    $region16: #{tpu_custom_call.1} parent=1 // pred_region
      %vm28 = vcmask 254976
      %29 = vst.msk [vmem:[#allocation2] sm:$0x3] %vm28, 0.0
    $region17: #{tpu_custom_call.1} parent=1 // pred_fallthru
      _
    %v30 = vld [vmem:[#allocation3] sm:$0x3]
    %v31 = vld [vmem:[%s1] sm:$0x3]
    %v32 = vsub.f32 %v31, 1.0
    %v33 = vmul.f32 %v30, %v30
    %v34 = vmul.f32 %v32, %v32
    %v35 = vadd.f32 %v33, %v34
    %v36 = vld [vmem:[#allocation2] sm:$0x3]
    %v37 = vadd.f32 %v36, %v35
    %vm38 = vcmask 254976
    %39 = vst.msk [vmem:[#allocation2] sm:$0x3] %vm38, %v37
    // Predicated region
    $region18: #{tpu_custom_call.1} parent=1 // pred_check
      %p40 = pneg %p24
    $region19: #{tpu_custom_call.1} parent=1 // pred_check_branch
      %42 = sbr.rel (%p40) target = $region21
    $region20: #{tpu_custom_call.1} parent=1 // pred_region
      %v43 = vld [vmem:[#allocation2] sm:$0x3]
      %v44 = vsel %vm38, %v43, 0.0
      %v45 = vrot.slane %v44, 4
      %v46 = vadd.f32 %v44, %v45
      %v47 = vrot.slane %v46, 2
      %v48 = vadd.f32 %v46, %v47
      %v49 = vrot.slane %v48, 1
      %v50 = vadd.f32 %v48, %v49
      %v51 = vmul.f32 %v50, 0.5
      %vm52 = vcmask 253952
      %53 = vst.msk [vmem:[#allocation6] sm:$0x1] %vm52, %v51
    $region21: #{tpu_custom_call.1} parent=1 // pred_fallthru
      _
    // Predicated region
    $region22: #{tpu_custom_call.1} parent=1 // pred_check
      _
    $region23: #{tpu_custom_call.1} parent=1 // pred_check_branch
      %55 = sbr.rel (0) target = $region25
    $region24: #{tpu_custom_call.1} parent=1 // pred_region
      %s57 = ssub.s32 16, 16
      %58 = vsyncadd [#allocation5], %s57
      %s60 = sshll.u32 [#allocation6], 4
      %s61 = int_to_ptr.vmem [resolvable:$true] %s60
      %63 = dma.vmem_to_hbm [thread:$0]  %s61, 16, %s2, [#allocation5]
    $region25: #{tpu_custom_call.1} parent=1 // pred_fallthru
      _
    // Predicated region
    $region26: #{tpu_custom_call.1} parent=1 // pred_check
      _
    $region27: #{tpu_custom_call.1} parent=1 // pred_check_branch
      %65 = sbr.rel (0) target = $region29
    $region28: #{tpu_custom_call.1} parent=1 // pred_region
      %66 = dma.done [#allocation5], 16
    $region29: #{tpu_custom_call.1} parent=1 // pred_fallthru
      _
    %67 = vsyncpa [#allocation4], 1
    %68 = vsyncpa [#allocation5], 1

</llo_original>
